<compile_context>
chip_gen: v5e
topology: v5e:2x2
jax: 0.10.0
libtpu: 0.0.40
codegen_flags: <defaults>
</compile_context>

<pallas_src>
import jax
import jax.numpy as jnp
from jax.experimental import pallas as pl
from jax.experimental.pallas import tpu as pltpu

LANE = 128
SUBLANE = 8
HIDDEN = 128
TB_MAX = 512          # batch tile: big enough to amortize ~0.35us/step overhead


def _round_up(x, m):
    return (x + m - 1) // m * m


def critic_kernel(x_ref, a_ref, w1x_ref, w1a_ref, b1_ref, w2_ref, b2_ref, o_ref):
    # Layer 1 (split along the concat axis): two MXU matmuls + f32 bias + ReLU.
    h = jnp.dot(x_ref[...], w1x_ref[...], preferred_element_type=jnp.float32)
    h = h + jnp.dot(a_ref[...], w1a_ref[...], preferred_element_type=jnp.float32)
    h = jnp.maximum(h + b1_ref[...], 0.0)                      # (TB, H)
    # Layer 2 (output width 1): VPU multiply + lane reduce, no MXU/lane padding.
    q = jnp.sum(h * w2_ref[...], axis=-1, keepdims=True) + b2_ref[...]
    o_ref[...] = q.astype(o_ref.dtype)                         # (TB, 1)


def prepare_critic_params(w1, b1, w2, b2, obs_features):
    """One-time param prep (call at init, NOT per forward step).

    Splits w1 rows into the obs / action halves of the virtual concat and
    reshapes the small tensors into 2-D VMEM-friendly layouts.
    """
    w1 = w1.astype(jnp.float32)
    w1x = w1[:obs_features, :]                 # (F_obs, H)
    w1a = w1[obs_features:, :]                 # (A, H)
    b1_2d = b1.reshape(1, -1).astype(jnp.float32)      # (1, H)
    w2_row = w2.reshape(1, -1).astype(jnp.float32)     # (1, H)  (row for VPU reduce)
    b2_2d = b2.reshape(1, 1).astype(jnp.float32)       # (1, 1)
    return w1x, w1a, b1_2d, w2_row, b2_2d


def critic_forward(x, a, prepped_params):
    """x: (B, obs0, obs1) f32, a: (B, act_dim) f32 -> (B, 1) f32 Q-values."""
    w1x, w1a, b1_2d, w2_row, b2_2d = prepped_params
    B = x.shape[0]
    F_obs = x.shape[1] * x.shape[2]
    A = a.shape[1]
    H = w1x.shape[1]

    x_flat = x.reshape(B, F_obs)

    # Batch tiling: TB rows per grid step, batch padded up to a TB multiple.
    TB = min(TB_MAX, _round_up(max(B, SUBLANE), SUBLANE))
    Bp = _round_up(B, TB)
    pad_rows = Bp - B
    if pad_rows:
        x_flat = jnp.pad(x_flat, ((0, pad_rows), (0, 0)))
        a_in = jnp.pad(a, ((0, pad_rows), (0, 0)))
    else:
        a_in = a

    flops = 2 * Bp * (F_obs + A) * H + 3 * Bp * H
    bytes_accessed = 4 * (Bp * F_obs + Bp * A               # activations
                          + F_obs * H + A * H + 2 * H + 1   # resident params
                          + Bp)                              # (Bp, 1) output

    grid = (Bp // TB,)
    pinned = lambda i: (0, 0)

    out = pl.pallas_call(
        critic_kernel,
        out_shape=jax.ShapeDtypeStruct((Bp, 1), jnp.float32),
        grid_spec=pl.GridSpec(
            grid=grid,
            in_specs=[
                pl.BlockSpec((TB, F_obs), lambda i: (i, 0)),   # x tile (pipelined)
                pl.BlockSpec((TB, A), lambda i: (i, 0)),       # a tile (pipelined)
                pl.BlockSpec((F_obs, H), pinned),              # w1 (obs rows)
                pl.BlockSpec((A, H), pinned),                  # w1 (act rows)
                pl.BlockSpec((1, H), pinned),                  # b1
                pl.BlockSpec((1, H), pinned),                  # w2 row
                pl.BlockSpec((1, 1), pinned),                  # b2
            ],
            out_specs=pl.BlockSpec((TB, 1), lambda i: (i, 0)),
        ),
        compiler_params=pltpu.CompilerParams(
            dimension_semantics=("parallel",)),
        cost_estimate=pl.CostEstimate(
            flops=flops, transcendentals=0, bytes_accessed=bytes_accessed),
    )(x_flat, a_in, w1x, w1a, b1_2d, w2_row, b2_2d)

    return out[:B]                                             # (B, 1)


def init_critic_params(key, obs_dim, act_dim, hidden=HIDDEN):
    """Mirror nn.Linear's U(-1/sqrt(fan_in), +1/sqrt(fan_in)) init."""
    F = obs_dim[0] * obs_dim[1] + act_dim
    k1, k2, k3, k4 = jax.random.split(key, 4)
    bound1 = 1.0 / jnp.sqrt(F)
    bound2 = 1.0 / jnp.sqrt(hidden)
    w1 = jax.random.uniform(k1, (F, hidden), jnp.float32, -bound1, bound1)
    b1 = jax.random.uniform(k2, (hidden,), jnp.float32, -bound1, bound1)
    w2 = jax.random.uniform(k3, (hidden, 1), jnp.float32, -bound2, bound2)
    b2 = jax.random.uniform(k4, (1,), jnp.float32, -bound2, bound2)
    return w1, b1, w2, b2


if __name__ == "__main__":
    key = jax.random.PRNGKey(0)
    obs_dim = (8, 16)     # flattens to 128 obs features
    act_dim = 8
    batch = 2

    k_params, k_x, k_a = jax.random.split(key, 3)
    w1, b1, w2, b2 = init_critic_params(k_params, obs_dim, act_dim)
    # One-time param prep (hoisted out of the per-step forward path).
    prepped = prepare_critic_params(w1, b1, w2, b2, obs_dim[0] * obs_dim[1])

    x = jax.random.normal(k_x, (batch, obs_dim[0], obs_dim[1]), jnp.float32)
    a = jax.random.normal(k_a, (batch, act_dim), jnp.float32)

    q = critic_forward(x, a, prepped)
    q = jax.block_until_ready(q)
    assert q.shape == (batch, 1)

    # Reference: full f32 math, identical to the PyTorch critic.
    x_cat = jnp.concatenate([x.reshape(batch, -1), a], axis=1)
    q_ref = jnp.maximum(x_cat @ w1 + b1, 0.0) @ w2 + b2
    assert jnp.allclose(q, q_ref, atol=1e-4, rtol=1e-4), "mismatch vs f32 ref"

    print("KERNEL_OK")
</pallas_src>

<mosaic_0001>
module attributes {stable_mosaic.version = 11 : i64} {
  func.func @critic_kernel(%arg0: i32, %arg1: memref<8x128xf32, #tpu.memory_space<vmem>>, %arg2: memref<8x8xf32, #tpu.memory_space<vmem>>, %arg3: memref<128x128xf32, #tpu.memory_space<vmem>>, %arg4: memref<8x128xf32, #tpu.memory_space<vmem>>, %arg5: memref<1x128xf32, #tpu.memory_space<vmem>>, %arg6: memref<1x128xf32, #tpu.memory_space<vmem>>, %arg7: memref<1x1xf32, #tpu.memory_space<vmem>>, %arg8: memref<8x1xf32, #tpu.memory_space<vmem>>) attributes {dimension_semantics = [#tpu.dimension_semantics<parallel>], iteration_bounds = array<i64: 1>, scalar_prefetch = 0 : i64, scratch_operands = 0 : i64, tpu.core_type = #tpu.core_type<tc>, window_params = [{transform_indices = @transform_0, window_bounds = array<i64: 8, 128>}, {transform_indices = @transform_1, window_bounds = array<i64: 8, 8>}, {pipeline_mode = #tpu.pipeline_mode<synchronous>, transform_indices = @transform_2, window_bounds = array<i64: 128, 128>}, {pipeline_mode = #tpu.pipeline_mode<synchronous>, transform_indices = @transform_3, window_bounds = array<i64: 8, 128>}, {pipeline_mode = #tpu.pipeline_mode<synchronous>, transform_indices = @transform_4, window_bounds = array<i64: 1, 128>}, {pipeline_mode = #tpu.pipeline_mode<synchronous>, transform_indices = @transform_5, window_bounds = array<i64: 1, 128>}, {pipeline_mode = #tpu.pipeline_mode<synchronous>, transform_indices = @transform_6, window_bounds = array<i64: 1, 1>}, {transform_indices = @transform_7, window_bounds = array<i64: 8, 1>}]} {
    %c0 = arith.constant 0 : index
    %c0_0 = arith.constant 0 : index
    %0 = vector.load %arg1[%c0, %c0_0] : memref<8x128xf32, #tpu.memory_space<vmem>>, vector<8x128xf32>
    %c0_1 = arith.constant 0 : index
    %c0_2 = arith.constant 0 : index
    %1 = vector.load %arg3[%c0_1, %c0_2] : memref<128x128xf32, #tpu.memory_space<vmem>>, vector<128x128xf32>
    %cst = arith.constant dense<0.000000e+00> : vector<8x128xf32>
    %2 = tpu.matmul %0, %1, %cst {dimension_numbers = #tpu.dot_dimension_numbers<[1], [0], [0], [1], [0, 0, 1, 1], [], []>} : vector<8x128xf32>, vector<128x128xf32>, vector<8x128xf32> -> vector<8x128xf32>
    %c0_3 = arith.constant 0 : index
    %c0_4 = arith.constant 0 : index
    %3 = vector.load %arg2[%c0_3, %c0_4] : memref<8x8xf32, #tpu.memory_space<vmem>>, vector<8x8xf32>
    %c0_5 = arith.constant 0 : index
    %c0_6 = arith.constant 0 : index
    %4 = vector.load %arg4[%c0_5, %c0_6] : memref<8x128xf32, #tpu.memory_space<vmem>>, vector<8x128xf32>
    %cst_7 = arith.constant dense<0.000000e+00> : vector<8x128xf32>
    %5 = tpu.matmul %3, %4, %cst_7 {dimension_numbers = #tpu.dot_dimension_numbers<[1], [0], [0], [1], [0, 0, 1, 1], [], []>} : vector<8x8xf32>, vector<8x128xf32>, vector<8x128xf32> -> vector<8x128xf32>
    %6 = arith.addf %2, %5 : vector<8x128xf32>
    %c0_8 = arith.constant 0 : index
    %c0_9 = arith.constant 0 : index
    %7 = vector.load %arg5[%c0_8, %c0_9] : memref<1x128xf32, #tpu.memory_space<vmem>>, vector<1x128xf32>
    %8 = vector.broadcast %7 : vector<1x128xf32> to vector<8x128xf32>
    %9 = arith.addf %6, %8 : vector<8x128xf32>
    %cst_10 = arith.constant 0.000000e+00 : f32
    %10 = vector.broadcast %cst_10 : f32 to vector<8x128xf32>
    %11 = arith.maximumf %9, %10 : vector<8x128xf32>
    %c0_11 = arith.constant 0 : index
    %c0_12 = arith.constant 0 : index
    %12 = vector.load %arg6[%c0_11, %c0_12] : memref<1x128xf32, #tpu.memory_space<vmem>>, vector<1x128xf32>
    %13 = vector.broadcast %12 : vector<1x128xf32> to vector<8x128xf32>
    %14 = arith.mulf %11, %13 : vector<8x128xf32>
    %cst_13 = arith.constant dense<0.000000e+00> : vector<8xf32>
    %15 = vector.multi_reduction <add>, %14, %cst_13 [1] : vector<8x128xf32> to vector<8xf32>
    %16 = vector.shape_cast %15 : vector<8xf32> to vector<8x1xf32>
    %c0_14 = arith.constant 0 : index
    %c0_15 = arith.constant 0 : index
    %17 = vector.load %arg7[%c0_14, %c0_15] : memref<1x1xf32, #tpu.memory_space<vmem>>, vector<1x1xf32>
    %18 = vector.broadcast %17 : vector<1x1xf32> to vector<8x1xf32>
    %19 = arith.addf %16, %18 : vector<8x1xf32>
    %c0_16 = arith.constant 0 : index
    %c0_17 = arith.constant 0 : index
    %20 = vector.load %arg8[%c0_16, %c0_17] : memref<8x1xf32, #tpu.memory_space<vmem>>, vector<8x1xf32>
    tpu.vector_store %arg8[%c0_16, %c0_17], %19 {strides = array<i32>} : memref<8x1xf32, #tpu.memory_space<vmem>>, vector<8x1xf32>,
    return
  }
  func.func @transform_0(%arg0: i32) -> (i32, i32) {
    %c0_i32 = arith.constant 0 : i32
    %c0_i32_0 = arith.constant 0 : i32
    return %arg0, %c0_i32 : i32, i32
  }
  func.func @transform_1(%arg0: i32) -> (i32, i32) {
    %c0_i32 = arith.constant 0 : i32
    %c0_i32_0 = arith.constant 0 : i32
    return %arg0, %c0_i32 : i32, i32
  }
  func.func @transform_2(%arg0: i32) -> (i32, i32) {
    %c0_i32 = arith.constant 0 : i32
    %c0_i32_0 = arith.constant 0 : i32
    %c0_i32_1 = arith.constant 0 : i32
    return %c0_i32, %c0_i32_0 : i32, i32
  }
  func.func @transform_3(%arg0: i32) -> (i32, i32) {
    %c0_i32 = arith.constant 0 : i32
    %c0_i32_0 = arith.constant 0 : i32
    %c0_i32_1 = arith.constant 0 : i32
    return %c0_i32, %c0_i32_0 : i32, i32
  }
  func.func @transform_4(%arg0: i32) -> (i32, i32) {
    %c0_i32 = arith.constant 0 : i32
    %c0_i32_0 = arith.constant 0 : i32
    %c0_i32_1 = arith.constant 0 : i32
    return %c0_i32, %c0_i32_0 : i32, i32
  }
  func.func @transform_5(%arg0: i32) -> (i32, i32) {
    %c0_i32 = arith.constant 0 : i32
    %c0_i32_0 = arith.constant 0 : i32
    %c0_i32_1 = arith.constant 0 : i32
    return %c0_i32, %c0_i32_0 : i32, i32
  }
  func.func @transform_6(%arg0: i32) -> (i32, i32) {
    %c0_i32 = arith.constant 0 : i32
    %c0_i32_0 = arith.constant 0 : i32
    %c0_i32_1 = arith.constant 0 : i32
    return %c0_i32, %c0_i32_0 : i32, i32
  }
  func.func @transform_7(%arg0: i32) -> (i32, i32) {
    %c0_i32 = arith.constant 0 : i32
    %c0_i32_0 = arith.constant 0 : i32
    return %arg0, %c0_i32 : i32, i32
  }
}

</mosaic_0001>

<llo_original>
// kernel: tpu_custom_call.1
$region0: #{tpu_custom_call.1}
  #allocation0 [shape = 'u32[]', space=smem, size = 0x4, offset = 0x4, fixed_abs, tag = 'smem constant byte address 0x4 - core index']
  #allocation1 [shape = 'u32[72,128]{1,0:T(1,128)}', space=vmem, size = 0x9000, scoped, tag = 'internal scratch']
  #allocation2 [shape = 'f32[1,1]{1,0:T(1,128)S(1)}', space=vmem, size = 0x200, scoped, tag = 'scoped memory for tpu_custom_call.1']
  %s0 = inlined_call_operand.hbm [shape: f32[8,128], index: 0, kind: input, shape index: {}]
  %s1 = inlined_call_operand.hbm [shape: f32[8,8], index: 1, kind: input, shape index: {}]
  %s2 = inlined_call_operand.hbm [shape: f32[128,128], index: 2, kind: input, shape index: {}]
  %s3 = inlined_call_operand.hbm [shape: f32[8,128], index: 3, kind: input, shape index: {}]
  %s4 = inlined_call_operand.vmem [shape: f32[1,128], index: 4, kind: input, shape index: {}]
  %s5 = inlined_call_operand.vmem [shape: f32[1,128], index: 5, kind: input, shape index: {}]
  %s6 = inlined_call_operand.<no memory space> [shape: f32[1,1], index: 6, kind: input, shape index: {}]
  %s7 = inlined_call_operand.vmem [shape: f32[8,1], index: 7, kind: output, shape index: {}]
  %s8 = sld [smem:[#allocation0]]
  $region54: #{tpu_custom_call.1} parent=0
    _
  %s10 = ssub.s32 1, %s8
  %s11 = scalar_select 0, %s10, %s8
  %v12 = vstv %s6
  %13 = vst [vmem:[#allocation2] sm:$0x1] %v12
  $region1: #{tpu_custom_call.1} parent=0
    #allocation3 [shape = 'u8[4096]{0}', space=vmem, size = 0x1000, scoped, tag = 'input window, operand 0, single buffered']
    #allocation4 [shape = 's32[1]{0}', space=sflag, size = 0x4, scoped, tag = 'scoped memory for tpu_custom_call.1']
    #allocation5 [shape = 'u8[4096]{0}', space=vmem, size = 0x1000, scoped, tag = 'input window, operand 1, single buffered']
    #allocation6 [shape = 's32[1]{0}', space=sflag, size = 0x4, scoped, tag = 'scoped memory for tpu_custom_call.1']
    #allocation7 [shape = 'u8[65536]{0}', space=vmem, size = 0x10000, scoped, tag = 'input window, operand 2, single buffered']
    #allocation8 [shape = 'u8[4096]{0}', space=vmem, size = 0x1000, scoped, tag = 'input window, operand 3, single buffered']
    #allocation9 [shape = 's32[1]{0}', space=sflag, size = 0x4, scoped, tag = 'scoped memory for tpu_custom_call.1']
    %14 = vsyncpa [#allocation4], 0
    %15 = vsyncpa [#allocation6], 0
    %16 = vsyncpa [#allocation9], 0
    // Predicated region
    $region2: #{tpu_custom_call.1} parent=1 // pred_check
      _
    $region3: #{tpu_custom_call.1} parent=1 // pred_check_branch
      %18 = sbr.rel (0) target = $region5
    $region4: #{tpu_custom_call.1} parent=1 // pred_region
      %20 = vsyncadd [#allocation4], 0
      %s22 = sshll.u32 %s0, 4
      %s23 = int_to_ptr.hbm [resolvable:$true] %s22
      %s24 = sshll.u32 [#allocation3], 4
      %s25 = int_to_ptr.vmem [resolvable:$true] %s24
      %27 = dma.hbm_to_vmem [thread:$0]  %s23, 128, %s25, [#allocation4]
    $region5: #{tpu_custom_call.1} parent=1 // pred_fallthru
      _
    // Predicated region
    $region6: #{tpu_custom_call.1} parent=1 // pred_check
      _
    $region7: #{tpu_custom_call.1} parent=1 // pred_check_branch
      %29 = sbr.rel (0) target = $region9
    $region8: #{tpu_custom_call.1} parent=1 // pred_region
      %31 = vsyncadd [#allocation6], 0
      %s33 = sshll.u32 %s1, 4
      %s34 = int_to_ptr.hbm [resolvable:$true] %s33
      %s35 = sshll.u32 [#allocation5], 4
      %s36 = int_to_ptr.vmem [resolvable:$true] %s35
      %38 = dma.hbm_to_vmem [thread:$0]  %s34, 128, %s36, [#allocation6]
    $region9: #{tpu_custom_call.1} parent=1 // pred_fallthru
      _
    // Predicated region
    $region10: #{tpu_custom_call.1} parent=1 // pred_check
      _
    $region11: #{tpu_custom_call.1} parent=1 // pred_check_branch
      %40 = sbr.rel (0) target = $region13
    $region12: #{tpu_custom_call.1} parent=1 // pred_region
      %42 = vsyncadd [#allocation6], 0
      %s43 = sshll.u32 %s2, 4
      %s44 = int_to_ptr.hbm [resolvable:$true] %s43
      %s45 = sshll.u32 [#allocation7], 4
      %s46 = int_to_ptr.vmem [resolvable:$true] %s45
      %51 = dma.hbm_to_vmem [thread:$0]  %s44, 2048, %s46, [#allocation6], 128, 128, 8
    $region13: #{tpu_custom_call.1} parent=1 // pred_fallthru
      _
    // Predicated region
    $region14: #{tpu_custom_call.1} parent=1 // pred_check
      _
    $region15: #{tpu_custom_call.1} parent=1 // pred_check_branch
      %53 = sbr.rel (0) target = $region17
    $region16: #{tpu_custom_call.1} parent=1 // pred_region
      %55 = vsyncadd [#allocation9], 0
      %s57 = sshll.u32 %s3, 4
      %s58 = int_to_ptr.hbm [resolvable:$true] %s57
      %s59 = sshll.u32 [#allocation8], 4
      %s60 = int_to_ptr.vmem [resolvable:$true] %s59
      %62 = dma.hbm_to_vmem [thread:$0]  %s58, 128, %s60, [#allocation9]
    $region17: #{tpu_custom_call.1} parent=1 // pred_fallthru
      _
    // Predicated region
    $region18: #{tpu_custom_call.1} parent=1 // pred_check
      _
    $region19: #{tpu_custom_call.1} parent=1 // pred_check_branch
      %64 = sbr.rel (0) target = $region21
    $region20: #{tpu_custom_call.1} parent=1 // pred_region
      _
    $region21: #{tpu_custom_call.1} parent=1 // pred_fallthru
      _
    // Predicated region
    $region22: #{tpu_custom_call.1} parent=1 // pred_check
      _
    $region23: #{tpu_custom_call.1} parent=1 // pred_check_branch
      %66 = sbr.rel (0) target = $region25
    $region24: #{tpu_custom_call.1} parent=1 // pred_region
      _
    $region25: #{tpu_custom_call.1} parent=1 // pred_fallthru
      _
    // Predicated region
    $region26: #{tpu_custom_call.1} parent=1 // pred_check
      _
    $region27: #{tpu_custom_call.1} parent=1 // pred_check_branch
      %68 = sbr.rel (0) target = $region29
    $region28: #{tpu_custom_call.1} parent=1 // pred_region
      _
    $region29: #{tpu_custom_call.1} parent=1 // pred_fallthru
      _
    // Predicated region
    $region30: #{tpu_custom_call.1} parent=1 // pred_check
      _
    $region31: #{tpu_custom_call.1} parent=1 // pred_check_branch
      %70 = sbr.rel (0) target = $region33
    $region32: #{tpu_custom_call.1} parent=1 // pred_region
      %72 = dma.done [#allocation4], 128
    $region33: #{tpu_custom_call.1} parent=1 // pred_fallthru
      _
    // Predicated region
    $region34: #{tpu_custom_call.1} parent=1 // pred_check
      _
    $region35: #{tpu_custom_call.1} parent=1 // pred_check_branch
      %74 = sbr.rel (0) target = $region37
    $region36: #{tpu_custom_call.1} parent=1 // pred_region
      %76 = dma.done [#allocation6], 128
    $region37: #{tpu_custom_call.1} parent=1 // pred_fallthru
      _
    // Predicated region
    $region38: #{tpu_custom_call.1} parent=1 // pred_check
      _
    $region39: #{tpu_custom_call.1} parent=1 // pred_check_branch
      %78 = sbr.rel (0) target = $region41
    $region40: #{tpu_custom_call.1} parent=1 // pred_region
      %80 = dma.done [#allocation6], 2048
    $region41: #{tpu_custom_call.1} parent=1 // pred_fallthru
      _
    // Predicated region
    $region42: #{tpu_custom_call.1} parent=1 // pred_check
      _
    $region43: #{tpu_custom_call.1} parent=1 // pred_check_branch
      %82 = sbr.rel (0) target = $region45
    $region44: #{tpu_custom_call.1} parent=1 // pred_region
      %84 = dma.done [#allocation9], 128
    $region45: #{tpu_custom_call.1} parent=1 // pred_fallthru
      _
    %v85 = vld [vmem:[#allocation3] sm:$0xff]
    %v86 = vld [vmem:[#allocation7] sm:$0xff]
    %v87 = vld [vmem:[#allocation7 + $0x8] sm:$0xff]
    %v88 = vld [vmem:[#allocation7 + $0x10] sm:$0xff]
    %v89 = vld [vmem:[#allocation7 + $0x18] sm:$0xff]
    %v90 = vld [vmem:[#allocation7 + $0x20] sm:$0xff]
    %v91 = vld [vmem:[#allocation7 + $0x28] sm:$0xff]
    %v92 = vld [vmem:[#allocation7 + $0x30] sm:$0xff]
    %v93 = vld [vmem:[#allocation7 + $0x38] sm:$0xff]
    %v94 = vld [vmem:[#allocation7 + $0x40] sm:$0xff]
    %v95 = vld [vmem:[#allocation7 + $0x48] sm:$0xff]
    %v96 = vld [vmem:[#allocation7 + $0x50] sm:$0xff]
    %v97 = vld [vmem:[#allocation7 + $0x58] sm:$0xff]
    %v98 = vld [vmem:[#allocation7 + $0x60] sm:$0xff]
    %v99 = vld [vmem:[#allocation7 + $0x68] sm:$0xff]
    %v100 = vld [vmem:[#allocation7 + $0x70] sm:$0xff]
    %v101 = vld [vmem:[#allocation7 + $0x78] sm:$0xff]
    %v102 = vld [vmem:[#allocation5] sm:$0xff]
    %v103 = vld [vmem:[#allocation8] sm:$0xff]
    %vm104 = vcmask 64512
    %v106 = vsel %vm104, %v102, 0
    %108 = vmatpush.msra.mxu0 0.0
    %109 = vmatpush.msra.mxu0 0.0
    %110 = vmatpush.msra.mxu0 0.0
    %111 = vmatpush.msra.mxu0 0.0
    %112 = vmatpush.msra.mxu0 0.0
    %113 = vmatpush.msra.mxu0 0.0
    %114 = vmatpush.msra.mxu0 0.0
    %115 = vmatpush.msra.mxu0 0.0
    %116 = vmatpush.msra.mxu0 0.0
    %117 = vmatpush.msra.mxu0 0.0
    %118 = vmatpush.msra.mxu0 0.0
    %119 = vmatpush.msra.mxu0 0.0
    %120 = vmatpush.msra.mxu0 0.0
    %121 = vmatpush.msra.mxu0 0.0
    %122 = vmatpush.msra.mxu0 0.0
    %123 = vmatpush.msra.mxu0 %v103
    %124 = vmatmul.f32.gmra.mxu0 %v106
    %v125 = vpop.f32.mrf.mxu0
    %v126 = vadd.f32 0.0, %v125
    %127 = vdwg.mxu0
    %128 = vmatpush.msra.mxu0 %v101
    %129 = vmatpush.msra.mxu0 %v100
    %130 = vmatpush.msra.mxu0 %v99
    %131 = vmatpush.msra.mxu0 %v98
    %132 = vmatpush.msra.mxu0 %v97
    %133 = vmatpush.msra.mxu0 %v96
    %134 = vmatpush.msra.mxu0 %v95
    %135 = vmatpush.msra.mxu0 %v94
    %136 = vmatpush.msra.mxu0 %v93
    %137 = vmatpush.msra.mxu0 %v92
    %138 = vmatpush.msra.mxu0 %v91
    %139 = vmatpush.msra.mxu0 %v90
    %140 = vmatpush.msra.mxu0 %v89
    %141 = vmatpush.msra.mxu0 %v88
    %142 = vmatpush.msra.mxu0 %v87
    %143 = vmatpush.msra.mxu0 %v86
    %144 = vmatmul.f32.gmra.mxu0 %v85
    %v145 = vpop.f32.mrf.mxu0
    %v146 = vadd.f32 %v126, %v145
    %147 = vdwg.mxu0
    %v148 = vld [vmem:[%s4] sm:$0x1]
    %v150 = vperm.slane %v148, 0
    %v152 = vadd.f32 %v146, %v150
    %v153 = vmax.f32 %v152, 0.0
    %v154 = vld [vmem:[%s5] sm:$0x1]
    %v156 = vperm.slane %v154, 0
    %v158 = vmul.f32 %v153, %v156
    %159 = vadd.xlane.f32.xlu0 %v158
    %v160 = vpop.xlane.xlu0 %159
    %v161 = vld [vmem:[#allocation2] sm:$0x1]
    %v163 = vperm.slane %v161, 0
    %v165 = vadd.f32 %v160, %v163
    %vm166 = vcmask 7168
    %167 = vst.msk [vmem:[%s7] sm:$0xff] %vm166, %v165
    // Predicated region
    $region46: #{tpu_custom_call.1} parent=1 // pred_check
      _
    $region47: #{tpu_custom_call.1} parent=1 // pred_check_branch
      %169 = sbr.rel (0) target = $region49
    $region48: #{tpu_custom_call.1} parent=1 // pred_region
      _
    $region49: #{tpu_custom_call.1} parent=1 // pred_fallthru
      _
    // Predicated region
    $region50: #{tpu_custom_call.1} parent=1 // pred_check
      _
    $region51: #{tpu_custom_call.1} parent=1 // pred_check_branch
      %171 = sbr.rel (0) target = $region53
    $region52: #{tpu_custom_call.1} parent=1 // pred_region
      _
    $region53: #{tpu_custom_call.1} parent=1 // pred_fallthru
      _
    %172 = vsyncpa [#allocation4], 1
    %173 = vsyncpa [#allocation6], 1
    %174 = vsyncpa [#allocation9], 1

</llo_original>
